<compile_context>
chip_gen: v5e
topology: v5e:2x2
jax: 0.10.0
libtpu: 0.0.40
codegen_flags: <defaults>
</compile_context>

<pallas_src>
import jax
import jax.numpy as jnp
from jax.experimental import pallas as pl
from jax.experimental.pallas import tpu as pltpu

LEAK = 0.01
BN_EPS = 1e-5


def _critic_kernel(scale_ref, shift_ref, state_ref, action_ref,
                   w1_ref, b1_ref,
                   w2s_ref, w2a_ref, b2_ref,
                   w3_ref, b3_ref,
                   w4_ref, b4_ref,
                   out_ref):
    """One batch tile of the critic forward pass."""
    def lrelu(x):
        return jnp.where(x >= 0, x, LEAK * x)

    # --- BatchNorm1d folded into a per-feature affine (full-batch stats
    #     precomputed in the wrapper; f32 elementwise) ---
    s_bn = state_ref[...] * scale_ref[...] + shift_ref[...]

    # --- fcs1 + leaky_relu (MXU: bf16 inputs, f32 accumulation) ---
    x = lrelu(jnp.dot(s_bn.astype(jnp.bfloat16), w1_ref[...],
                      preferred_element_type=jnp.float32) + b1_ref[...])

    # --- fc2 over cat((x, action)), split-weight form.
    #     x @ W2s on the MXU; the tiny K=action_size action contribution is
    #     a handful of broadcast FMAs on the VPU (avoids a padded MXU pass).
    h = (jnp.dot(x.astype(jnp.bfloat16), w2s_ref[...],
                 preferred_element_type=jnp.float32) + b2_ref[...])
    a = action_ref[...]                          # (TB, A) f32
    w2a = w2a_ref[...].astype(jnp.float32)       # (A, fc2)
    for k in range(w2a.shape[0]):                # A is small & static
        h = h + a[:, k:k + 1] * w2a[k:k + 1, :]
    x = lrelu(h)

    # --- fc3 + leaky_relu (MXU) ---
    x = lrelu(jnp.dot(x.astype(jnp.bfloat16), w3_ref[...],
                      preferred_element_type=jnp.float32) + b3_ref[...])

    # --- fc4 (N=1): VPU multiply + lane reduction instead of a padded
    #     MXU pass with 1 of 128/256 useful output columns ---
    q = jnp.sum(x * w4_ref[...].astype(jnp.float32), axis=-1, keepdims=True)
    out_ref[...] = q + b4_ref[...]


def critic_forward(state, action, params, tile_b=256):
    """state: (B, S), action: (B, A) -> Q-values (B, 1) float32."""
    state = state.astype(jnp.float32)
    action = action.astype(jnp.float32)
    B, S = state.shape
    A = action.shape[1]
    F1 = params["w1"].shape[1]
    F2 = params["w2s"].shape[1]
    F3 = params["w3"].shape[1]

    # Fold BatchNorm1d (training-mode: full-batch stats, biased variance,
    # eps=1e-5) into a per-feature affine computed ONCE over the whole batch,
    # so tiling the batch inside the kernel cannot change the statistics.
    mean = jnp.mean(state, axis=0, keepdims=True)
    var = jnp.mean(jnp.square(state - mean), axis=0, keepdims=True)
    scale = params["gamma"] * jax.lax.rsqrt(var + BN_EPS)
    shift = params["beta"] - mean * scale

    # Batch tiling: pad B up to a multiple of the tile, slice the result back.
    tb = min(tile_b, B)
    n_tiles = pl.cdiv(B, tb)
    bp = n_tiles * tb
    if bp != B:
        pad = bp - B
        state = jnp.pad(state, ((0, pad), (0, 0)))
        action = jnp.pad(action, ((0, pad), (0, 0)))

    def const(shape):  # weights/biases: same block every grid step (resident)
        return pl.BlockSpec(shape, lambda i: (0, 0))

    grid_spec = pltpu.PrefetchScalarGridSpec(
        num_scalar_prefetch=0,
        grid=(n_tiles,),
        in_specs=[
            const((1, S)),                                   # scale
            const((1, S)),                                   # shift
            pl.BlockSpec((tb, S), lambda i: (i, 0)),         # state tile
            pl.BlockSpec((tb, A), lambda i: (i, 0)),         # action tile
            const((S, F1)), const((1, F1)),                  # w1, b1
            const((F1, F2)), const((A, F2)), const((1, F2)),  # w2s, w2a, b2
            const((F2, F3)), const((1, F3)),                 # w3, b3
            const((1, F3)), const((1, 1)),                   # w4_row, b4
        ],
        out_specs=pl.BlockSpec((tb, 1), lambda i: (i, 0)),
    )

    out = pl.pallas_call(
        _critic_kernel,
        out_shape=jax.ShapeDtypeStruct((bp, 1), jnp.float32),
        grid_spec=grid_spec,
        compiler_params=pltpu.CompilerParams(
            dimension_semantics=("parallel",)),   # megacore sharding on v7x
    )(scale, shift, state, action,
      params["w1"], params["b1"],
      params["w2s"], params["w2a"], params["b2"],
      params["w3"], params["b3"],
      params["w4_row"], params["b4"])

    return out[:B]


def init_params(key, state_size, action_size, fc1=256, fc2=128, fc3=128,
                leak=LEAK):
    """Parameter init mirroring the PyTorch module (kaiming-normal fcs1/fc2,
    uniform(-0.003, 0.003) fc3, default torch-Linear init for fc4 and biases).
    Matmul weights are stored in bf16 (MXU native); biases/BN affine in f32."""
    keys = jax.random.split(key, 8)

    def kaiming_normal(k, fan_in, fan_out, a):
        gain = jnp.sqrt(2.0 / (1.0 + a * a))
        std = gain / jnp.sqrt(fan_in)
        return std * jax.random.normal(k, (fan_in, fan_out), jnp.float32)

    def bias_default(k, fan_in, fan_out):
        bound = 1.0 / jnp.sqrt(fan_in)
        return jax.random.uniform(k, (1, fan_out), jnp.float32, -bound, bound)

    def linear_default_w(k, fan_in, fan_out):
        bound = 1.0 / jnp.sqrt(fan_in)
        return jax.random.uniform(k, (fan_in, fan_out), jnp.float32,
                                  -bound, bound)

    # fc2 weight over concat(fc1, action) — split into the two input halves.
    w2_full = kaiming_normal(keys[2], fc1 + action_size, fc2, leak)
    w4 = linear_default_w(keys[6], fc3, 1)

    return {
        # BatchNorm1d affine params (PyTorch init: gamma=1, beta=0)
        "gamma": jnp.ones((1, state_size), jnp.float32),
        "beta": jnp.zeros((1, state_size), jnp.float32),
        # fcs1
        "w1": kaiming_normal(keys[0], state_size, fc1, leak).astype(jnp.bfloat16),
        "b1": bias_default(keys[1], state_size, fc1),
        # fc2 (split)
        "w2s": w2_full[:fc1, :].astype(jnp.bfloat16),
        "w2a": w2_full[fc1:, :].astype(jnp.bfloat16),
        "b2": bias_default(keys[3], fc1 + action_size, fc2),
        # fc3: uniform(-0.003, 0.003)
        "w3": jax.random.uniform(keys[4], (fc2, fc3), jnp.float32,
                                 -0.003, 0.003).astype(jnp.bfloat16),
        "b3": bias_default(keys[5], fc2, fc3),
        # fc4: default torch Linear init; stored as a (1, fc3) row for the
        #      VPU-multiply + lane-reduction head.
        "w4_row": w4.T.astype(jnp.bfloat16),
        "b4": bias_default(keys[7], fc3, 1),
    }


if __name__ == "__main__":
    B, STATE, ACTION = 64, 16, 4
    key = jax.random.PRNGKey(0)
    k_state, k_action, k_params = jax.random.split(key, 3)

    state = jax.random.normal(k_state, (B, STATE), dtype=jnp.float32)
    action = jax.random.normal(k_action, (B, ACTION), dtype=jnp.float32)
    params = init_params(k_params, STATE, ACTION)

    # tile_b=32 -> 2 grid steps at this small demo size (exercises the grid,
    # resident weights, and full-batch BN fold across tiles).
    q = critic_forward(state, action, params, tile_b=32)
    q = jax.block_until_ready(q)

    # Pure-JAX reference mirroring the kernel math (bf16 matmul inputs,
    # f32 accumulation, full-batch BatchNorm statistics).
    lrelu = lambda x: jnp.where(x >= 0, x, LEAK * x)
    mean = jnp.mean(state, axis=0, keepdims=True)
    var = jnp.mean(jnp.square(state - mean), axis=0, keepdims=True)
    scale = params["gamma"] * jax.lax.rsqrt(var + BN_EPS)
    shift = params["beta"] - mean * scale
    s_bn = state * scale + shift
    x = lrelu(jnp.dot(s_bn.astype(jnp.bfloat16), params["w1"],
                      preferred_element_type=jnp.float32) + params["b1"])
    h = (jnp.dot(x.astype(jnp.bfloat16), params["w2s"],
                 preferred_element_type=jnp.float32)
         + action @ params["w2a"].astype(jnp.float32) + params["b2"])
    x = lrelu(h)
    x = lrelu(jnp.dot(x.astype(jnp.bfloat16), params["w3"],
                      preferred_element_type=jnp.float32) + params["b3"])
    ref = (jnp.sum(x * params["w4_row"].astype(jnp.float32),
                   axis=-1, keepdims=True) + params["b4"])

    assert q.shape == (B, 1)
    assert jnp.allclose(q, ref, atol=2e-3, rtol=2e-2), \
        float(jnp.max(jnp.abs(q - ref)))

    print("KERNEL_OK")
</pallas_src>

<mosaic_0001>
module attributes {stable_mosaic.version = 11 : i64} {
  func.func @_critic_kernel(%arg0: i32, %arg1: memref<1x16xf32, #tpu.memory_space<vmem>>, %arg2: memref<1x16xf32, #tpu.memory_space<vmem>>, %arg3: memref<32x16xf32, #tpu.memory_space<vmem>>, %arg4: memref<32x4xf32, #tpu.memory_space<vmem>>, %arg5: memref<16x256xbf16, #tpu.memory_space<vmem>>, %arg6: memref<1x256xf32, #tpu.memory_space<vmem>>, %arg7: memref<256x128xbf16, #tpu.memory_space<vmem>>, %arg8: memref<4x128xbf16, #tpu.memory_space<vmem>>, %arg9: memref<1x128xf32, #tpu.memory_space<vmem>>, %arg10: memref<128x128xbf16, #tpu.memory_space<vmem>>, %arg11: memref<1x128xf32, #tpu.memory_space<vmem>>, %arg12: memref<1x128xbf16, #tpu.memory_space<vmem>>, %arg13: memref<1x1xf32, #tpu.memory_space<vmem>>, %arg14: memref<32x1xf32, #tpu.memory_space<vmem>>) attributes {dimension_semantics = [#tpu.dimension_semantics<parallel>], iteration_bounds = array<i64: 2>, scalar_prefetch = 0 : i64, scratch_operands = 0 : i64, tpu.core_type = #tpu.core_type<tc>, window_params = [{pipeline_mode = #tpu.pipeline_mode<synchronous>, transform_indices = @transform_0, window_bounds = array<i64: 1, 16>}, {pipeline_mode = #tpu.pipeline_mode<synchronous>, transform_indices = @transform_1, window_bounds = array<i64: 1, 16>}, {transform_indices = @transform_2, window_bounds = array<i64: 32, 16>}, {transform_indices = @transform_3, window_bounds = array<i64: 32, 4>}, {pipeline_mode = #tpu.pipeline_mode<synchronous>, transform_indices = @transform_4, window_bounds = array<i64: 16, 256>}, {pipeline_mode = #tpu.pipeline_mode<synchronous>, transform_indices = @transform_5, window_bounds = array<i64: 1, 256>}, {pipeline_mode = #tpu.pipeline_mode<synchronous>, transform_indices = @transform_6, window_bounds = array<i64: 256, 128>}, {pipeline_mode = #tpu.pipeline_mode<synchronous>, transform_indices = @transform_7, window_bounds = array<i64: 4, 128>}, {pipeline_mode = #tpu.pipeline_mode<synchronous>, transform_indices = @transform_8, window_bounds = array<i64: 1, 128>}, {pipeline_mode = #tpu.pipeline_mode<synchronous>, transform_indices = @transform_9, window_bounds = array<i64: 128, 128>}, {pipeline_mode = #tpu.pipeline_mode<synchronous>, transform_indices = @transform_10, window_bounds = array<i64: 1, 128>}, {pipeline_mode = #tpu.pipeline_mode<synchronous>, transform_indices = @transform_11, window_bounds = array<i64: 1, 128>}, {pipeline_mode = #tpu.pipeline_mode<synchronous>, transform_indices = @transform_12, window_bounds = array<i64: 1, 1>}, {transform_indices = @transform_13, window_bounds = array<i64: 32, 1>}]} {
    %c0 = arith.constant 0 : index
    %c0_0 = arith.constant 0 : index
    %0 = vector.load %arg3[%c0, %c0_0] : memref<32x16xf32, #tpu.memory_space<vmem>>, vector<32x16xf32>
    %c0_1 = arith.constant 0 : index
    %c0_2 = arith.constant 0 : index
    %1 = vector.load %arg1[%c0_1, %c0_2] : memref<1x16xf32, #tpu.memory_space<vmem>>, vector<1x16xf32>
    %2 = vector.broadcast %1 : vector<1x16xf32> to vector<32x16xf32>
    %3 = arith.mulf %0, %2 : vector<32x16xf32>
    %c0_3 = arith.constant 0 : index
    %c0_4 = arith.constant 0 : index
    %4 = vector.load %arg2[%c0_3, %c0_4] : memref<1x16xf32, #tpu.memory_space<vmem>>, vector<1x16xf32>
    %5 = vector.broadcast %4 : vector<1x16xf32> to vector<32x16xf32>
    %6 = arith.addf %3, %5 : vector<32x16xf32>
    %7 = arith.truncf %6 : vector<32x16xf32> to vector<32x16xbf16>
    %c0_5 = arith.constant 0 : index
    %c0_6 = arith.constant 0 : index
    %8 = vector.load %arg5[%c0_5, %c0_6] : memref<16x256xbf16, #tpu.memory_space<vmem>>, vector<16x256xbf16>
    %cst = arith.constant dense<0.000000e+00> : vector<32x256xf32>
    %9 = tpu.matmul %7, %8, %cst {dimension_numbers = #tpu.dot_dimension_numbers<[1], [0], [0], [1], [0, 0, 1, 1], [], []>} : vector<32x16xbf16>, vector<16x256xbf16>, vector<32x256xf32> -> vector<32x256xf32>
    %c0_7 = arith.constant 0 : index
    %c0_8 = arith.constant 0 : index
    %10 = vector.load %arg6[%c0_7, %c0_8] : memref<1x256xf32, #tpu.memory_space<vmem>>, vector<1x256xf32>
    %11 = vector.broadcast %10 : vector<1x256xf32> to vector<32x256xf32>
    %12 = arith.addf %9, %11 : vector<32x256xf32>
    %cst_9 = arith.constant 0.000000e+00 : f32
    %13 = vector.broadcast %cst_9 : f32 to vector<32x256xf32>
    %14 = arith.cmpf oge, %12, %13 : vector<32x256xf32>
    %cst_10 = arith.constant 0.00999999977 : f32
    %15 = vector.broadcast %cst_10 : f32 to vector<32x256xf32>
    %16 = arith.mulf %15, %12 : vector<32x256xf32>
    %17 = arith.select %14, %12, %16 : vector<32x256xi1>, vector<32x256xf32>
    %18 = arith.truncf %17 : vector<32x256xf32> to vector<32x256xbf16>
    %c0_11 = arith.constant 0 : index
    %c0_12 = arith.constant 0 : index
    %19 = vector.load %arg7[%c0_11, %c0_12] : memref<256x128xbf16, #tpu.memory_space<vmem>>, vector<256x128xbf16>
    %cst_13 = arith.constant dense<0.000000e+00> : vector<32x128xf32>
    %20 = tpu.matmul %18, %19, %cst_13 {dimension_numbers = #tpu.dot_dimension_numbers<[1], [0], [0], [1], [0, 0, 1, 1], [], []>} : vector<32x256xbf16>, vector<256x128xbf16>, vector<32x128xf32> -> vector<32x128xf32>
    %c0_14 = arith.constant 0 : index
    %c0_15 = arith.constant 0 : index
    %21 = vector.load %arg9[%c0_14, %c0_15] : memref<1x128xf32, #tpu.memory_space<vmem>>, vector<1x128xf32>
    %22 = vector.broadcast %21 : vector<1x128xf32> to vector<32x128xf32>
    %23 = arith.addf %20, %22 : vector<32x128xf32>
    %c0_16 = arith.constant 0 : index
    %c0_17 = arith.constant 0 : index
    %24 = vector.load %arg4[%c0_16, %c0_17] : memref<32x4xf32, #tpu.memory_space<vmem>>, vector<32x4xf32>
    %c0_18 = arith.constant 0 : index
    %c0_19 = arith.constant 0 : index
    %25 = vector.load %arg8[%c0_18, %c0_19] : memref<4x128xbf16, #tpu.memory_space<vmem>>, vector<4x128xbf16>
    %26 = arith.extf %25 : vector<4x128xbf16> to vector<4x128xf32>
    %27 = vector.extract_strided_slice %24 {offsets = [0, 0], sizes = [32, 1], strides = [1, 1]} : vector<32x4xf32> to vector<32x1xf32>
    %28 = vector.extract_strided_slice %26 {offsets = [0, 0], sizes = [1, 128], strides = [1, 1]} : vector<4x128xf32> to vector<1x128xf32>
    %29 = vector.broadcast %27 : vector<32x1xf32> to vector<32x128xf32>
    %30 = vector.broadcast %28 : vector<1x128xf32> to vector<32x128xf32>
    %31 = arith.mulf %29, %30 : vector<32x128xf32>
    %32 = arith.addf %23, %31 : vector<32x128xf32>
    %33 = vector.extract_strided_slice %24 {offsets = [0, 1], sizes = [32, 1], strides = [1, 1]} : vector<32x4xf32> to vector<32x1xf32>
    %34 = vector.extract_strided_slice %26 {offsets = [1, 0], sizes = [1, 128], strides = [1, 1]} : vector<4x128xf32> to vector<1x128xf32>
    %35 = vector.broadcast %33 : vector<32x1xf32> to vector<32x128xf32>
    %36 = vector.broadcast %34 : vector<1x128xf32> to vector<32x128xf32>
    %37 = arith.mulf %35, %36 : vector<32x128xf32>
    %38 = arith.addf %32, %37 : vector<32x128xf32>
    %39 = vector.extract_strided_slice %24 {offsets = [0, 2], sizes = [32, 1], strides = [1, 1]} : vector<32x4xf32> to vector<32x1xf32>
    %40 = vector.extract_strided_slice %26 {offsets = [2, 0], sizes = [1, 128], strides = [1, 1]} : vector<4x128xf32> to vector<1x128xf32>
    %41 = vector.broadcast %39 : vector<32x1xf32> to vector<32x128xf32>
    %42 = vector.broadcast %40 : vector<1x128xf32> to vector<32x128xf32>
    %43 = arith.mulf %41, %42 : vector<32x128xf32>
    %44 = arith.addf %38, %43 : vector<32x128xf32>
    %45 = vector.extract_strided_slice %24 {offsets = [0, 3], sizes = [32, 1], strides = [1, 1]} : vector<32x4xf32> to vector<32x1xf32>
    %46 = vector.extract_strided_slice %26 {offsets = [3, 0], sizes = [1, 128], strides = [1, 1]} : vector<4x128xf32> to vector<1x128xf32>
    %47 = vector.broadcast %45 : vector<32x1xf32> to vector<32x128xf32>
    %48 = vector.broadcast %46 : vector<1x128xf32> to vector<32x128xf32>
    %49 = arith.mulf %47, %48 : vector<32x128xf32>
    %50 = arith.addf %44, %49 : vector<32x128xf32>
    %cst_20 = arith.constant 0.000000e+00 : f32
    %51 = vector.broadcast %cst_20 : f32 to vector<32x128xf32>
    %52 = arith.cmpf oge, %50, %51 : vector<32x128xf32>
    %cst_21 = arith.constant 0.00999999977 : f32
    %53 = vector.broadcast %cst_21 : f32 to vector<32x128xf32>
    %54 = arith.mulf %53, %50 : vector<32x128xf32>
    %55 = arith.select %52, %50, %54 : vector<32x128xi1>, vector<32x128xf32>
    %56 = arith.truncf %55 : vector<32x128xf32> to vector<32x128xbf16>
    %c0_22 = arith.constant 0 : index
    %c0_23 = arith.constant 0 : index
    %57 = vector.load %arg10[%c0_22, %c0_23] : memref<128x128xbf16, #tpu.memory_space<vmem>>, vector<128x128xbf16>
    %cst_24 = arith.constant dense<0.000000e+00> : vector<32x128xf32>
    %58 = tpu.matmul %56, %57, %cst_24 {dimension_numbers = #tpu.dot_dimension_numbers<[1], [0], [0], [1], [0, 0, 1, 1], [], []>} : vector<32x128xbf16>, vector<128x128xbf16>, vector<32x128xf32> -> vector<32x128xf32>
    %c0_25 = arith.constant 0 : index
    %c0_26 = arith.constant 0 : index
    %59 = vector.load %arg11[%c0_25, %c0_26] : memref<1x128xf32, #tpu.memory_space<vmem>>, vector<1x128xf32>
    %60 = vector.broadcast %59 : vector<1x128xf32> to vector<32x128xf32>
    %61 = arith.addf %58, %60 : vector<32x128xf32>
    %cst_27 = arith.constant 0.000000e+00 : f32
    %62 = vector.broadcast %cst_27 : f32 to vector<32x128xf32>
    %63 = arith.cmpf oge, %61, %62 : vector<32x128xf32>
    %cst_28 = arith.constant 0.00999999977 : f32
    %64 = vector.broadcast %cst_28 : f32 to vector<32x128xf32>
    %65 = arith.mulf %64, %61 : vector<32x128xf32>
    %66 = arith.select %63, %61, %65 : vector<32x128xi1>, vector<32x128xf32>
    %c0_29 = arith.constant 0 : index
    %c0_30 = arith.constant 0 : index
    %67 = vector.load %arg12[%c0_29, %c0_30] : memref<1x128xbf16, #tpu.memory_space<vmem>>, vector<1x128xbf16>
    %68 = arith.extf %67 : vector<1x128xbf16> to vector<1x128xf32>
    %69 = vector.broadcast %68 : vector<1x128xf32> to vector<32x128xf32>
    %70 = arith.mulf %66, %69 : vector<32x128xf32>
    %cst_31 = arith.constant dense<0.000000e+00> : vector<32xf32>
    %71 = vector.multi_reduction <add>, %70, %cst_31 [1] : vector<32x128xf32> to vector<32xf32>
    %72 = vector.shape_cast %71 : vector<32xf32> to vector<32x1xf32>
    %c0_32 = arith.constant 0 : index
    %c0_33 = arith.constant 0 : index
    %73 = vector.load %arg13[%c0_32, %c0_33] : memref<1x1xf32, #tpu.memory_space<vmem>>, vector<1x1xf32>
    %74 = vector.broadcast %73 : vector<1x1xf32> to vector<32x1xf32>
    %75 = arith.addf %72, %74 : vector<32x1xf32>
    %c0_34 = arith.constant 0 : index
    %c0_35 = arith.constant 0 : index
    %76 = vector.load %arg14[%c0_34, %c0_35] : memref<32x1xf32, #tpu.memory_space<vmem>>, vector<32x1xf32>
    tpu.vector_store %arg14[%c0_34, %c0_35], %75 {strides = array<i32>} : memref<32x1xf32, #tpu.memory_space<vmem>>, vector<32x1xf32>,
    return
  }
  func.func @transform_0(%arg0: i32) -> (i32, i32) {
    %c0_i32 = arith.constant 0 : i32
    %c0_i32_0 = arith.constant 0 : i32
    %c0_i32_1 = arith.constant 0 : i32
    return %c0_i32, %c0_i32_0 : i32, i32
  }
  func.func @transform_1(%arg0: i32) -> (i32, i32) {
    %c0_i32 = arith.constant 0 : i32
    %c0_i32_0 = arith.constant 0 : i32
    %c0_i32_1 = arith.constant 0 : i32
    return %c0_i32, %c0_i32_0 : i32, i32
  }
  func.func @transform_2(%arg0: i32) -> (i32, i32) {
    %c0_i32 = arith.constant 0 : i32
    %c0_i32_0 = arith.constant 0 : i32
    return %arg0, %c0_i32 : i32, i32
  }
  func.func @transform_3(%arg0: i32) -> (i32, i32) {
    %c0_i32 = arith.constant 0 : i32
    %c0_i32_0 = arith.constant 0 : i32
    return %arg0, %c0_i32 : i32, i32
  }
  func.func @transform_4(%arg0: i32) -> (i32, i32) {
    %c0_i32 = arith.constant 0 : i32
    %c0_i32_0 = arith.constant 0 : i32
    %c0_i32_1 = arith.constant 0 : i32
    return %c0_i32, %c0_i32_0 : i32, i32
  }
  func.func @transform_5(%arg0: i32) -> (i32, i32) {
    %c0_i32 = arith.constant 0 : i32
    %c0_i32_0 = arith.constant 0 : i32
    %c0_i32_1 = arith.constant 0 : i32
    return %c0_i32, %c0_i32_0 : i32, i32
  }
  func.func @transform_6(%arg0: i32) -> (i32, i32) {
    %c0_i32 = arith.constant 0 : i32
    %c0_i32_0 = arith.constant 0 : i32
    %c0_i32_1 = arith.constant 0 : i32
    return %c0_i32, %c0_i32_0 : i32, i32
  }
  func.func @transform_7(%arg0: i32) -> (i32, i32) {
    %c0_i32 = arith.constant 0 : i32
    %c0_i32_0 = arith.constant 0 : i32
    %c0_i32_1 = arith.constant 0 : i32
    return %c0_i32, %c0_i32_0 : i32, i32
  }
  func.func @transform_8(%arg0: i32) -> (i32, i32) {
    %c0_i32 = arith.constant 0 : i32
    %c0_i32_0 = arith.constant 0 : i32
    %c0_i32_1 = arith.constant 0 : i32
    return %c0_i32, %c0_i32_0 : i32, i32
  }
  func.func @transform_9(%arg0: i32) -> (i32, i32) {
    %c0_i32 = arith.constant 0 : i32
    %c0_i32_0 = arith.constant 0 : i32
    %c0_i32_1 = arith.constant 0 : i32
    return %c0_i32, %c0_i32_0 : i32, i32
  }
  func.func @transform_10(%arg0: i32) -> (i32, i32) {
    %c0_i32 = arith.constant 0 : i32
    %c0_i32_0 = arith.constant 0 : i32
    %c0_i32_1 = arith.constant 0 : i32
    return %c0_i32, %c0_i32_0 : i32, i32
  }
  func.func @transform_11(%arg0: i32) -> (i32, i32) {
    %c0_i32 = arith.constant 0 : i32
    %c0_i32_0 = arith.constant 0 : i32
    %c0_i32_1 = arith.constant 0 : i32
    return %c0_i32, %c0_i32_0 : i32, i32
  }
  func.func @transform_12(%arg0: i32) -> (i32, i32) {
    %c0_i32 = arith.constant 0 : i32
    %c0_i32_0 = arith.constant 0 : i32
    %c0_i32_1 = arith.constant 0 : i32
    return %c0_i32, %c0_i32_0 : i32, i32
  }
  func.func @transform_13(%arg0: i32) -> (i32, i32) {
    %c0_i32 = arith.constant 0 : i32
    %c0_i32_0 = arith.constant 0 : i32
    return %arg0, %c0_i32 : i32, i32
  }
}

</mosaic_0001>

<llo_original>
// kernel: tpu_custom_call.1
$region0: #{tpu_custom_call.1}
  #allocation0 [shape = 'u32[]', space=smem, size = 0x4, offset = 0x4, fixed_abs, tag = 'smem constant byte address 0x4 - core index']
  #allocation1 [shape = 'u32[72,128]{1,0:T(1,128)}', space=vmem, size = 0x9000, scoped, tag = 'internal scratch']
  #allocation2 [shape = 'f32[1,1]{1,0:T(1,128)S(1)}', space=vmem, size = 0x200, scoped, tag = 'scoped memory for tpu_custom_call.1']
  %s0 = inlined_call_operand.hbm [shape: f32[1,16], index: 0, kind: input, shape index: {}]
  %s1 = inlined_call_operand.hbm [shape: f32[1,16], index: 1, kind: input, shape index: {}]
  %s2 = inlined_call_operand.vmem [shape: f32[64,16], index: 2, kind: input, shape index: {}]
  %s3 = inlined_call_operand.vmem [shape: f32[64,4], index: 3, kind: input, shape index: {}]
  %s4 = inlined_call_operand.vmem [shape: bf16[16,256], index: 4, kind: input, shape index: {}]
  %s5 = inlined_call_operand.vmem [shape: f32[1,256], index: 5, kind: input, shape index: {}]
  %s6 = inlined_call_operand.vmem [shape: bf16[256,128], index: 6, kind: input, shape index: {}]
  %s7 = inlined_call_operand.vmem [shape: bf16[4,128], index: 7, kind: input, shape index: {}]
  %s8 = inlined_call_operand.vmem [shape: f32[1,128], index: 8, kind: input, shape index: {}]
  %s9 = inlined_call_operand.hbm [shape: bf16[128,128], index: 9, kind: input, shape index: {}]
  %s10 = inlined_call_operand.vmem [shape: f32[1,128], index: 10, kind: input, shape index: {}]
  %s11 = inlined_call_operand.vmem [shape: bf16[1,128], index: 11, kind: input, shape index: {}]
  %s12 = inlined_call_operand.<no memory space> [shape: f32[1,1], index: 12, kind: input, shape index: {}]
  %s13 = inlined_call_operand.vmem [shape: f32[64,1], index: 13, kind: output, shape index: {}]
  %s14 = sld [smem:[#allocation0]]
  $region97: #{tpu_custom_call.1} parent=0
    _
  %s16 = ssub.s32 1, %s14
  %s17 = scalar_select 0, %s16, %s14
  %v18 = vstv %s12
  %19 = vst [vmem:[#allocation2] sm:$0x1] %v18
  $region1: #{tpu_custom_call.1} parent=0
    #allocation3 [shape = 'u8[512]{0}', space=vmem, size = 0x400, scoped, tag = 'input window, operand 0, single buffered']
    #allocation4 [shape = 's32[2]{0}', space=sflag, size = 0x8, scoped, tag = 'scoped memory for tpu_custom_call.1']
    #allocation5 [shape = 'u8[512]{0}', space=vmem, size = 0x400, scoped, tag = 'input window, operand 1, single buffered']
    #allocation6 [shape = 's32[1]{0}', space=sflag, size = 0x4, scoped, tag = 'scoped memory for tpu_custom_call.1']
    #allocation7 [shape = 'u8[32768]{0}', space=vmem, size = 0x8000, scoped, tag = 'input window, operand 9, single buffered']
    %20 = vsyncpa [#allocation4], 0
    %21 = vsyncpa [#allocation6], 0
    loop: start=0, step=1, limit=4
    $region2: #{tpu_custom_call.1} parent=1 // loop_pre_header
      _
    $region3: #{tpu_custom_call.1} parent=1 // loop_header
      %s23 = sphi 0, %s27
      %p24 = scmp.ge.s32.totalorder %s23, 4
      %s31 = sphi 0, %s31
      %s33 = sphi 0, %s31
      %s34 = sphi 0, %s33
      %s48 = sphi 0, %s34
      %s52 = sphi 0, %s52
      %s54 = sphi 0, %s52
      %s55 = sphi 0, %s54
      %s69 = sphi 0, %s55
      %s75 = sphi 0, %s77
      %s78 = sphi 0, %s75
      %s79 = sphi 0, %s78
      %s95 = sphi 0, %s79
      %s101 = sphi 0, %s103
      %s104 = sphi 0, %s101
      %s105 = sphi 0, %s104
      %s121 = sphi 0, %s105
      %s125 = sphi 0, %s125
      %s127 = sphi 0, %s125
      %s128 = sphi 0, %s127
      %s142 = sphi 0, %s128
      %s146 = sphi 0, %s146
      %s148 = sphi 0, %s146
      %s149 = sphi 0, %s148
      %s163 = sphi 0, %s149
      %s167 = sphi 0, %s167
      %s169 = sphi 0, %s167
      %s170 = sphi 0, %s169
      %s184 = sphi 0, %s170
      %s188 = sphi 0, %s188
      %s190 = sphi 0, %s188
      %s191 = sphi 0, %s190
      %s205 = sphi 0, %s191
      %s209 = sphi 0, %s209
      %s211 = sphi 0, %s209
      %s212 = sphi 0, %s211
      %s226 = sphi 0, %s212
      %s230 = sphi 0, %s230
      %s232 = sphi 0, %s230
      %s233 = sphi 0, %s232
      %s247 = sphi 0, %s233
      %s251 = sphi 0, %s251
      %s253 = sphi 0, %s251
      %s254 = sphi 0, %s253
      %s268 = sphi 0, %s254
      %s272 = sphi 0, %s272
      %s274 = sphi 0, %s272
      %s275 = sphi 0, %s274
      %s289 = sphi 0, %s275
      %s293 = sphi 0, %s293
      %s295 = sphi 0, %s293
      %s296 = sphi 0, %s295
      %s310 = sphi 0, %s296
      %s316 = sphi 0, %s318
      %s319 = sphi 0, %s316
      %s320 = sphi 0, %s319
      %s336 = sphi 0, %s320
    $region4: #{tpu_custom_call.1} parent=1 // loop_header_branch
      %26 = sbr.rel (%p24) target = $region8
    $region5: #{tpu_custom_call.1} parent=1 // loop_body
      %s28 = ssub.s32 %s23, 1
      %s29 = ssub.s32 %s23, 2
      %s30 = sadd.s32 %s23, 1
      %s32 = sadd.s32 %s31, 1
      %p35 = scmp.eq.s32.totalorder %s23, 1
      %p36 = scmp.ne.s32.totalorder %s31, %s33
      %p37 = scmp.eq.s32.totalorder %s23, 0
      %p38 = por %p36, %p37
      %p39 = scmp.ne.s32.totalorder %s31, %s33
      %p40 = scmp.eq.s32.totalorder %s28, 1
      %p41 = por %p39, %p40
      %p42 = scmp.ne.s32.totalorder %s33, %s34
      %p43 = scmp.eq.s32.totalorder %s28, 0
      %p44 = por %p42, %p43
      %p45 = scmp.ne.s32.totalorder %s33, %s34
      %p46 = scmp.eq.s32.totalorder %s29, 1
      %p47 = por %p45, %p46
      %p49 = scmp.ne.s32.totalorder %s34, %s48
      %p50 = scmp.eq.s32.totalorder %s29, 0
      %p51 = por %p49, %p50
      %s53 = sadd.s32 %s52, 1
      %p56 = scmp.eq.s32.totalorder %s23, 1
      %p57 = scmp.ne.s32.totalorder %s52, %s54
      %p58 = scmp.eq.s32.totalorder %s23, 0
      %p59 = por %p57, %p58
      %p60 = scmp.ne.s32.totalorder %s52, %s54
      %p61 = scmp.eq.s32.totalorder %s28, 1
      %p62 = por %p60, %p61
      %p63 = scmp.ne.s32.totalorder %s54, %s55
      %p64 = scmp.eq.s32.totalorder %s28, 0
      %p65 = por %p63, %p64
      %p66 = scmp.ne.s32.totalorder %s54, %s55
      %p67 = scmp.eq.s32.totalorder %s29, 1
      %p68 = por %p66, %p67
      %p70 = scmp.ne.s32.totalorder %s55, %s69
      %p71 = scmp.eq.s32.totalorder %s29, 0
      %p72 = por %p70, %p71
      %s73 = ssub.s32 %s23, %s30
      %p74 = scmp.eq.s32.totalorder %s73, 0
      %s76 = sadd.s32 %s75, 1
      %s77 = scalar_select %p74, %s75, %s76
      %p80 = pneg %p74
      %p81 = scmp.eq.s32.totalorder %s23, 1
      %p82 = por %p80, %p81
      %p83 = scmp.ne.s32.totalorder %s75, %s78
      %p84 = scmp.eq.s32.totalorder %s23, 0
      %p85 = por %p83, %p84
      %p86 = scmp.ne.s32.totalorder %s75, %s78
      %p87 = scmp.eq.s32.totalorder %s28, 1
      %p88 = por %p86, %p87
      %p89 = scmp.ne.s32.totalorder %s78, %s79
      %p90 = scmp.eq.s32.totalorder %s28, 0
      %p91 = por %p89, %p90
      %p92 = scmp.ne.s32.totalorder %s78, %s79
      %p93 = scmp.eq.s32.totalorder %s29, 1
      %p94 = por %p92, %p93
      %p96 = scmp.ne.s32.totalorder %s79, %s95
      %p97 = scmp.eq.s32.totalorder %s29, 0
      %p98 = por %p96, %p97
      %s99 = ssub.s32 %s23, %s30
      %p100 = scmp.eq.s32.totalorder %s99, 0
      %s102 = sadd.s32 %s101, 1
      %s103 = scalar_select %p100, %s101, %s102
      %p106 = pneg %p100
      %p107 = scmp.eq.s32.totalorder %s23, 1
      %p108 = por %p106, %p107
      %p109 = scmp.ne.s32.totalorder %s101, %s104
      %p110 = scmp.eq.s32.totalorder %s23, 0
      %p111 = por %p109, %p110
      %p112 = scmp.ne.s32.totalorder %s101, %s104
      %p113 = scmp.eq.s32.totalorder %s28, 1
      %p114 = por %p112, %p113
      %p115 = scmp.ne.s32.totalorder %s104, %s105
      %p116 = scmp.eq.s32.totalorder %s28, 0
      %p117 = por %p115, %p116
      %p118 = scmp.ne.s32.totalorder %s104, %s105
      %p119 = scmp.eq.s32.totalorder %s29, 1
      %p120 = por %p118, %p119
      %p122 = scmp.ne.s32.totalorder %s105, %s121
      %p123 = scmp.eq.s32.totalorder %s29, 0
      %p124 = por %p122, %p123
      %s126 = sadd.s32 %s125, 1
      %p129 = scmp.eq.s32.totalorder %s23, 1
      %p130 = scmp.ne.s32.totalorder %s125, %s127
      %p131 = scmp.eq.s32.totalorder %s23, 0
      %p132 = por %p130, %p131
      %p133 = scmp.ne.s32.totalorder %s125, %s127
      %p134 = scmp.eq.s32.totalorder %s28, 1
      %p135 = por %p133, %p134
      %p136 = scmp.ne.s32.totalorder %s127, %s128
      %p137 = scmp.eq.s32.totalorder %s28, 0
      %p138 = por %p136, %p137
      %p139 = scmp.ne.s32.totalorder %s127, %s128
      %p140 = scmp.eq.s32.totalorder %s29, 1
      %p141 = por %p139, %p140
      %p143 = scmp.ne.s32.totalorder %s128, %s142
      %p144 = scmp.eq.s32.totalorder %s29, 0
      %p145 = por %p143, %p144
      %s147 = sadd.s32 %s146, 1
      %p150 = scmp.eq.s32.totalorder %s23, 1
      %p151 = scmp.ne.s32.totalorder %s146, %s148
      %p152 = scmp.eq.s32.totalorder %s23, 0
      %p153 = por %p151, %p152
      %p154 = scmp.ne.s32.totalorder %s146, %s148
      %p155 = scmp.eq.s32.totalorder %s28, 1
      %p156 = por %p154, %p155
      %p157 = scmp.ne.s32.totalorder %s148, %s149
      %p158 = scmp.eq.s32.totalorder %s28, 0
      %p159 = por %p157, %p158
      %p160 = scmp.ne.s32.totalorder %s148, %s149
      %p161 = scmp.eq.s32.totalorder %s29, 1
      %p162 = por %p160, %p161
      %p164 = scmp.ne.s32.totalorder %s149, %s163
      %p165 = scmp.eq.s32.totalorder %s29, 0
      %p166 = por %p164, %p165
      %s168 = sadd.s32 %s167, 1
      %p171 = scmp.eq.s32.totalorder %s23, 1
      %p172 = scmp.ne.s32.totalorder %s167, %s169
      %p173 = scmp.eq.s32.totalorder %s23, 0
      %p174 = por %p172, %p173
      %p175 = scmp.ne.s32.totalorder %s167, %s169
      %p176 = scmp.eq.s32.totalorder %s28, 1
      %p177 = por %p175, %p176
      %p178 = scmp.ne.s32.totalorder %s169, %s170
      %p179 = scmp.eq.s32.totalorder %s28, 0
      %p180 = por %p178, %p179
      %p181 = scmp.ne.s32.totalorder %s169, %s170
      %p182 = scmp.eq.s32.totalorder %s29, 1
      %p183 = por %p181, %p182
      %p185 = scmp.ne.s32.totalorder %s170, %s184
      %p186 = scmp.eq.s32.totalorder %s29, 0
      %p187 = por %p185, %p186
      %s189 = sadd.s32 %s188, 1
      %p192 = scmp.eq.s32.totalorder %s23, 1
      %p193 = scmp.ne.s32.totalorder %s188, %s190
      %p194 = scmp.eq.s32.totalorder %s23, 0
      %p195 = por %p193, %p194
      %p196 = scmp.ne.s32.totalorder %s188, %s190
      %p197 = scmp.eq.s32.totalorder %s28, 1
      %p198 = por %p196, %p197
      %p199 = scmp.ne.s32.totalorder %s190, %s191
      %p200 = scmp.eq.s32.totalorder %s28, 0
      %p201 = por %p199, %p200
      %p202 = scmp.ne.s32.totalorder %s190, %s191
      %p203 = scmp.eq.s32.totalorder %s29, 1
      %p204 = por %p202, %p203
      %p206 = scmp.ne.s32.totalorder %s191, %s205
      %p207 = scmp.eq.s32.totalorder %s29, 0
      %p208 = por %p206, %p207
      %s210 = sadd.s32 %s209, 1
      %p213 = scmp.eq.s32.totalorder %s23, 1
      %p214 = scmp.ne.s32.totalorder %s209, %s211
      %p215 = scmp.eq.s32.totalorder %s23, 0
      %p216 = por %p214, %p215
      %p217 = scmp.ne.s32.totalorder %s209, %s211
      %p218 = scmp.eq.s32.totalorder %s28, 1
      %p219 = por %p217, %p218
      %p220 = scmp.ne.s32.totalorder %s211, %s212
      %p221 = scmp.eq.s32.totalorder %s28, 0
      %p222 = por %p220, %p221
      %p223 = scmp.ne.s32.totalorder %s211, %s212
      %p224 = scmp.eq.s32.totalorder %s29, 1
      %p225 = por %p223, %p224
      %p227 = scmp.ne.s32.totalorder %s212, %s226
      %p228 = scmp.eq.s32.totalorder %s29, 0
      %p229 = por %p227, %p228
      %s231 = sadd.s32 %s230, 1
      %p234 = scmp.eq.s32.totalorder %s23, 1
      %p235 = scmp.ne.s32.totalorder %s230, %s232
      %p236 = scmp.eq.s32.totalorder %s23, 0
      %p237 = por %p235, %p236
      %p238 = scmp.ne.s32.totalorder %s230, %s232
      %p239 = scmp.eq.s32.totalorder %s28, 1
      %p240 = por %p238, %p239
      %p241 = scmp.ne.s32.totalorder %s232, %s233
      %p242 = scmp.eq.s32.totalorder %s28, 0
      %p243 = por %p241, %p242
      %p244 = scmp.ne.s32.totalorder %s232, %s233
      %p245 = scmp.eq.s32.totalorder %s29, 1
      %p246 = por %p244, %p245
      %p248 = scmp.ne.s32.totalorder %s233, %s247
      %p249 = scmp.eq.s32.totalorder %s29, 0
      %p250 = por %p248, %p249
      %s252 = sadd.s32 %s251, 1
      %p255 = scmp.eq.s32.totalorder %s23, 1
      %p256 = scmp.ne.s32.totalorder %s251, %s253
      %p257 = scmp.eq.s32.totalorder %s23, 0
      %p258 = por %p256, %p257
      %p259 = scmp.ne.s32.totalorder %s251, %s253
      %p260 = scmp.eq.s32.totalorder %s28, 1
      %p261 = por %p259, %p260
      %p262 = scmp.ne.s32.totalorder %s253, %s254
      %p263 = scmp.eq.s32.totalorder %s28, 0
      %p264 = por %p262, %p263
      %p265 = scmp.ne.s32.totalorder %s253, %s254
      %p266 = scmp.eq.s32.totalorder %s29, 1
      %p267 = por %p265, %p266
      %p269 = scmp.ne.s32.totalorder %s254, %s268
      %p270 = scmp.eq.s32.totalorder %s29, 0
      %p271 = por %p269, %p270
      %s273 = sadd.s32 %s272, 1
      %p276 = scmp.eq.s32.totalorder %s23, 1
      %p277 = scmp.ne.s32.totalorder %s272, %s274
      %p278 = scmp.eq.s32.totalorder %s23, 0
      %p279 = por %p277, %p278
      %p280 = scmp.ne.s32.totalorder %s272, %s274
      %p281 = scmp.eq.s32.totalorder %s28, 1
      %p282 = por %p280, %p281
      %p283 = scmp.ne.s32.totalorder %s274, %s275
      %p284 = scmp.eq.s32.totalorder %s28, 0
      %p285 = por %p283, %p284
      %p286 = scmp.ne.s32.totalorder %s274, %s275
      %p287 = scmp.eq.s32.totalorder %s29, 1
      %p288 = por %p286, %p287
      %p290 = scmp.ne.s32.totalorder %s275, %s289
      %p291 = scmp.eq.s32.totalorder %s29, 0
      %p292 = por %p290, %p291
      %s294 = sadd.s32 %s293, 1
      %p297 = scmp.eq.s32.totalorder %s23, 1
      %p298 = scmp.ne.s32.totalorder %s293, %s295
      %p299 = scmp.eq.s32.totalorder %s23, 0
      %p300 = por %p298, %p299
      %p301 = scmp.ne.s32.totalorder %s293, %s295
      %p302 = scmp.eq.s32.totalorder %s28, 1
      %p303 = por %p301, %p302
      %p304 = scmp.ne.s32.totalorder %s295, %s296
      %p305 = scmp.eq.s32.totalorder %s28, 0
      %p306 = por %p304, %p305
      %p307 = scmp.ne.s32.totalorder %s295, %s296
      %p308 = scmp.eq.s32.totalorder %s29, 1
      %p309 = por %p307, %p308
      %p311 = scmp.ne.s32.totalorder %s296, %s310
      %p312 = scmp.eq.s32.totalorder %s29, 0
      %p313 = por %p311, %p312
      %s314 = ssub.s32 %s23, %s30
      %p315 = scmp.eq.s32.totalorder %s314, 0
      %s317 = sadd.s32 %s316, 1
      %s318 = scalar_select %p315, %s316, %s317
      %p321 = pneg %p315
      %p322 = scmp.eq.s32.totalorder %s23, 1
      %p323 = por %p321, %p322
      %p324 = scmp.ne.s32.totalorder %s316, %s319
      %p325 = scmp.eq.s32.totalorder %s23, 0
      %p326 = por %p324, %p325
      %p327 = scmp.ne.s32.totalorder %s316, %s319
      %p328 = scmp.eq.s32.totalorder %s28, 1
      %p329 = por %p327, %p328
      %p330 = scmp.ne.s32.totalorder %s319, %s320
      %p331 = scmp.eq.s32.totalorder %s28, 0
      %p332 = por %p330, %p331
      %p333 = scmp.ne.s32.totalorder %s319, %s320
      %p334 = scmp.eq.s32.totalorder %s29, 1
      %p335 = por %p333, %p334
      %p337 = scmp.ne.s32.totalorder %s320, %s336
      %p338 = scmp.eq.s32.totalorder %s29, 0
      %p339 = por %p337, %p338
      %p340 = scmp.le.s32.totalorder 1, %s23
      %p341 = scmp.lt.s32.totalorder %s23, 3
      %p342 = pnand %p340, %p341
      %p343 = pneg %p342
      // Predicated region
      $region9: #{tpu_custom_call.1} parent=5 // pred_check
        _
      $region10: #{tpu_custom_call.1} parent=5 // pred_check_branch
        %345 = sbr.rel (%p342) target = $region12
      $region11: #{tpu_custom_call.1} parent=5 // pred_region
        %s346 = ssub.s32 %s23, 1
        // Predicated region
        $region13: #{tpu_custom_call.1} parent=11 // pred_check
          %p347 = pneg %p44
        $region14: #{tpu_custom_call.1} parent=11 // pred_check_branch
          %349 = sbr.rel (%p347) target = $region16
        $region15: #{tpu_custom_call.1} parent=11 // pred_region
          %351 = vsyncadd [#allocation4], 0
          %s353 = sshll.u32 %s0, 4
          %s354 = int_to_ptr.hbm [resolvable:$true] %s353
          %s355 = sshll.u32 [#allocation3], 4
          %s356 = int_to_ptr.vmem [resolvable:$true] %s355
          %358 = dma.hbm_to_vmem [thread:$0]  %s354, 16, %s356, [#allocation4]
        $region16: #{tpu_custom_call.1} parent=11 // pred_fallthru
          _
        // Predicated region
        $region17: #{tpu_custom_call.1} parent=11 // pred_check
          %p359 = pneg %p65
        $region18: #{tpu_custom_call.1} parent=11 // pred_check_branch
          %361 = sbr.rel (%p359) target = $region20
        $region19: #{tpu_custom_call.1} parent=11 // pred_region
          %363 = vsyncadd [#allocation6], 0
          %s365 = sshll.u32 %s1, 4
          %s366 = int_to_ptr.hbm [resolvable:$true] %s365
          %s367 = sshll.u32 [#allocation5], 4
          %s368 = int_to_ptr.vmem [resolvable:$true] %s367
          %370 = dma.hbm_to_vmem [thread:$0]  %s366, 16, %s368, [#allocation6]
        $region20: #{tpu_custom_call.1} parent=11 // pred_fallthru
          _
        // Predicated region
        $region21: #{tpu_custom_call.1} parent=11 // pred_check
          %p371 = pneg %p138
        $region22: #{tpu_custom_call.1} parent=11 // pred_check_branch
          %373 = sbr.rel (%p371) target = $region24
        $region23: #{tpu_custom_call.1} parent=11 // pred_region
          _
        $region24: #{tpu_custom_call.1} parent=11 // pred_fallthru
          _
        // Predicated region
        $region25: #{tpu_custom_call.1} parent=11 // pred_check
          %p374 = pneg %p159
        $region26: #{tpu_custom_call.1} parent=11 // pred_check_branch
          %376 = sbr.rel (%p374) target = $region28
        $region27: #{tpu_custom_call.1} parent=11 // pred_region
          _
        $region28: #{tpu_custom_call.1} parent=11 // pred_fallthru
          _
        // Predicated region
        $region29: #{tpu_custom_call.1} parent=11 // pred_check
          %p377 = pneg %p180
        $region30: #{tpu_custom_call.1} parent=11 // pred_check_branch
          %379 = sbr.rel (%p377) target = $region32
        $region31: #{tpu_custom_call.1} parent=11 // pred_region
          _
        $region32: #{tpu_custom_call.1} parent=11 // pred_fallthru
          _
        // Predicated region
        $region33: #{tpu_custom_call.1} parent=11 // pred_check
          %p380 = pneg %p201
        $region34: #{tpu_custom_call.1} parent=11 // pred_check_branch
          %382 = sbr.rel (%p380) target = $region36
        $region35: #{tpu_custom_call.1} parent=11 // pred_region
          _
        $region36: #{tpu_custom_call.1} parent=11 // pred_fallthru
          _
        // Predicated region
        $region37: #{tpu_custom_call.1} parent=11 // pred_check
          %p383 = pneg %p222
        $region38: #{tpu_custom_call.1} parent=11 // pred_check_branch
          %385 = sbr.rel (%p383) target = $region40
        $region39: #{tpu_custom_call.1} parent=11 // pred_region
          _
        $region40: #{tpu_custom_call.1} parent=11 // pred_fallthru
          _
        // Predicated region
        $region41: #{tpu_custom_call.1} parent=11 // pred_check
          %p386 = pneg %p243
        $region42: #{tpu_custom_call.1} parent=11 // pred_check_branch
          %388 = sbr.rel (%p386) target = $region44
        $region43: #{tpu_custom_call.1} parent=11 // pred_region
          %390 = vsyncadd [#allocation6], 0
          %s391 = sshll.u32 %s9, 4
          %s392 = int_to_ptr.hbm [resolvable:$true] %s391
          %s393 = sshll.u32 [#allocation7], 4
          %s394 = int_to_ptr.vmem [resolvable:$true] %s393
          %399 = dma.hbm_to_vmem [thread:$0]  %s392, 1024, %s394, [#allocation6], 64, 64, 4
        $region44: #{tpu_custom_call.1} parent=11 // pred_fallthru
          _
        // Predicated region
        $region45: #{tpu_custom_call.1} parent=11 // pred_check
          %p400 = pneg %p264
        $region46: #{tpu_custom_call.1} parent=11 // pred_check_branch
          %402 = sbr.rel (%p400) target = $region48
        $region47: #{tpu_custom_call.1} parent=11 // pred_region
          _
        $region48: #{tpu_custom_call.1} parent=11 // pred_fallthru
          _
        // Predicated region
        $region49: #{tpu_custom_call.1} parent=11 // pred_check
          %p403 = pneg %p285
        $region50: #{tpu_custom_call.1} parent=11 // pred_check_branch
          %405 = sbr.rel (%p403) target = $region52
        $region51: #{tpu_custom_call.1} parent=11 // pred_region
          _
        $region52: #{tpu_custom_call.1} parent=11 // pred_fallthru
          _
        // Predicated region
        $region53: #{tpu_custom_call.1} parent=11 // pred_check
          %p406 = pneg %p306
        $region54: #{tpu_custom_call.1} parent=11 // pred_check_branch
          %408 = sbr.rel (%p406) target = $region56
        $region55: #{tpu_custom_call.1} parent=11 // pred_region
          _
        $region56: #{tpu_custom_call.1} parent=11 // pred_fallthru
          _
      $region12: #{tpu_custom_call.1} parent=5 // pred_fallthru
        _
      %p409 = scmp.lt.s32.totalorder %s23, 2
      // Predicated region
      $region57: #{tpu_custom_call.1} parent=5 // pred_check
        %p410 = pneg %p409
      $region58: #{tpu_custom_call.1} parent=5 // pred_check_branch
        %412 = sbr.rel (%p410) target = $region60
      $region59: #{tpu_custom_call.1} parent=5 // pred_region
        // Predicated region
        $region61: #{tpu_custom_call.1} parent=59 // pred_check
          %p413 = pneg %p85
        $region62: #{tpu_custom_call.1} parent=59 // pred_check_branch
          %415 = sbr.rel (%p413) target = $region64
        $region63: #{tpu_custom_call.1} parent=59 // pred_region
          %s416 = smul.u32 4, %s23
          %p417 = scmp.lt.s32.totalorder %s416, 7
          %s418 = scalar_select %p417, %s416, 7
          %s419 = smul.addr %s418, 8
          %s420 = scalar_lea.vmem %s2, %s419
          %s421 = smul.u32 4, %s23
        $region64: #{tpu_custom_call.1} parent=59 // pred_fallthru
          _
        // Predicated region
        $region65: #{tpu_custom_call.1} parent=59 // pred_check
          %p422 = pneg %p111
        $region66: #{tpu_custom_call.1} parent=59 // pred_check_branch
          %424 = sbr.rel (%p422) target = $region68
        $region67: #{tpu_custom_call.1} parent=59 // pred_region
          %s425 = smul.u32 4, %s23
          %p426 = scmp.lt.s32.totalorder %s425, 7
          %s427 = scalar_select %p426, %s425, 7
          %s428 = smul.addr %s427, 8
          %s429 = scalar_lea.vmem %s3, %s428
          %s430 = smul.u32 4, %s23
        $region68: #{tpu_custom_call.1} parent=59 // pred_fallthru
          _
      $region60: #{tpu_custom_call.1} parent=5 // pred_fallthru
        _
      %p431 = scmp.le.s32.totalorder 1, %s23
      %p432 = scmp.lt.s32.totalorder %s23, 3
      %p433 = pnand %p431, %p432
      %p434 = pneg %p433
      // Predicated region
      $region69: #{tpu_custom_call.1} parent=5 // pred_check
        _
      $region70: #{tpu_custom_call.1} parent=5 // pred_check_branch
        %436 = sbr.rel (%p433) target = $region72
      $region71: #{tpu_custom_call.1} parent=5 // pred_region
        %s437 = ssub.s32 %s23, 1
        // Predicated region
        $region73: #{tpu_custom_call.1} parent=71 // pred_check
          %p438 = pneg %p44
        $region74: #{tpu_custom_call.1} parent=71 // pred_check_branch
          %440 = sbr.rel (%p438) target = $region76
        $region75: #{tpu_custom_call.1} parent=71 // pred_region
          %442 = dma.done [#allocation4], 16
        $region76: #{tpu_custom_call.1} parent=71 // pred_fallthru
          _
        // Predicated region
        $region77: #{tpu_custom_call.1} parent=71 // pred_check
          %p443 = pneg %p65
        $region78: #{tpu_custom_call.1} parent=71 // pred_check_branch
          %445 = sbr.rel (%p443) target = $region80
        $region79: #{tpu_custom_call.1} parent=71 // pred_region
          %447 = dma.done [#allocation6], 16
        $region80: #{tpu_custom_call.1} parent=71 // pred_fallthru
          _
        // Predicated region
        $region81: #{tpu_custom_call.1} parent=71 // pred_check
          %p448 = pneg %p243
        $region82: #{tpu_custom_call.1} parent=71 // pred_check_branch
          %450 = sbr.rel (%p448) target = $region84
        $region83: #{tpu_custom_call.1} parent=71 // pred_region
          %452 = dma.done [#allocation6], 1024
        $region84: #{tpu_custom_call.1} parent=71 // pred_fallthru
          _
        %p453 = pneg %p44
        %p454 = pneg %p41
        %p455 = pneg %p65
        %p456 = pneg %p62
        %s457 = smul.u32 4, %s28
        %p458 = scmp.lt.s32.totalorder %s457, 7
        %s459 = scalar_select %p458, %s457, 7
        %s460 = smul.addr %s459, 8
        %s461 = scalar_lea.vmem %s2, %s460
        %p462 = pneg %p91
        %p463 = pneg %p88
        %s464 = smul.u32 4, %s28
        %p465 = scmp.lt.s32.totalorder %s464, 7
        %s466 = scalar_select %p465, %s464, 7
        %s467 = smul.addr %s466, 8
        %s468 = scalar_lea.vmem %s3, %s467
        %p469 = pneg %p117
        %p470 = pneg %p114
        %p471 = pneg %p138
        %p472 = pneg %p135
        %p473 = pneg %p159
        %p474 = pneg %p156
        %p475 = pneg %p180
        %p476 = pneg %p177
        %p477 = pneg %p201
        %p478 = pneg %p198
        %p479 = pneg %p222
        %p480 = pneg %p219
        %p481 = pneg %p243
        %p482 = pneg %p240
        %p483 = pneg %p264
        %p484 = pneg %p261
        %p485 = pneg %p285
        %p486 = pneg %p282
        %p487 = pneg %p306
        %p488 = pneg %p303
        %p489 = pneg %p332
        %p490 = pneg %p329
        %s491 = smul.u32 4, %s28
        %p492 = scmp.lt.s32.totalorder %s491, 7
        %s493 = scalar_select %p492, %s491, 7
        %s494 = smul.addr %s493, 8
        %s495 = scalar_lea.vmem %s13, %s494
        %s496 = smul.u32 4, %s28
        %p497 = scmp.lt.s32.totalorder %s496, 7
        %s498 = scalar_select %p497, %s496, 7
        %s499 = smul.addr %s498, 8
        %s500 = scalar_lea.vmem %s2, %s499
        %s501 = smul.u32 4, %s28
        %s502 = smul.u32 4, %s28
        %p503 = scmp.lt.s32.totalorder %s502, 7
        %s504 = scalar_select %p503, %s502, 7
        %s505 = smul.addr %s504, 8
        %s506 = scalar_lea.vmem %s3, %s505
        %s507 = smul.u32 4, %s28
        %s508 = smul.u32 4, %s28
        %p509 = scmp.lt.s32.totalorder %s508, 7
        %s510 = scalar_select %p509, %s508, 7
        %s511 = smul.addr %s510, 8
        %s512 = scalar_lea.vmem %s13, %s511
        %s513 = smul.u32 4, %s28
        %v515 = vld [vmem:[%s500] sm:$0xff]
        %v516 = vld [vmem:[%s500 + $0x8] sm:$0xff]
        %v517 = vld [vmem:[%s500 + $0x10] sm:$0xff]
        %v518 = vld [vmem:[%s500 + $0x18] sm:$0xff]
        %v519 = vld [vmem:[#allocation3] sm:$0x1]
        %v521 = vperm.slane %v519, 0
        %v523 = vmul.f32 %v515, %v521
        %v524 = vmul.f32 %v516, %v521
        %v525 = vmul.f32 %v517, %v521
        %v526 = vmul.f32 %v518, %v521
        %v527 = vld [vmem:[#allocation5] sm:$0x1]
        %v529 = vperm.slane %v527, 0
        %v531 = vadd.f32 %v523, %v529
        %v532 = vadd.f32 %v524, %v529
        %v533 = vadd.f32 %v525, %v529
        %v534 = vadd.f32 %v526, %v529
        %v535 = vpack.c.bf16 %v532, %v531
        %v536 = vpack.c.bf16 %v534, %v533
        %v537 = vld [vmem:[%s4] sm:$0xff]
        %v538 = vld [vmem:[%s4 + $0x8] sm:$0xff]
        %v539 = vld [vmem:[%s5] sm:$0x3]
        %v541 = vperm.slane %v539, 0
        %v542 = vperm.slane %v539, 1
        %v547 = vunpack.c.l.b16 %v537
        %v548 = vunpack.c.h.b16 %v537
        %v549 = vunpack.c.l.b16 %v538
        %v550 = vunpack.c.h.b16 %v538
        %v551 = vpack.c.b16 %v549, %v547
        %v552 = vpack.c.b16 %v550, %v548
        %vm555 = vcmask 130048
        %v557 = vsel %vm555, %v535, 0
        %v560 = vsel %vm555, %v536, 0
        %562 = vmatpush.bf16.msra.mxu0 0
        %563 = vmatpush.bf16.msra.mxu0 0
        %564 = vmatpush.bf16.msra.mxu0 0
        %565 = vmatpush.bf16.msra.mxu0 0
        %566 = vmatpush.bf16.msra.mxu0 0
        %567 = vmatpush.bf16.msra.mxu0 0
        %568 = vmatpush.bf16.msra.mxu0 0
        %569 = vmatpush.bf16.msra.mxu0 %v551
        %570 = vmatmul.bf16.gmra.mxu0 %v557
        %v571 = vpop.f32.mrf.mxu0
        %v572 = vadd.f32 %v541, %v571
        %v573 = vpop.f32.mrf.mxu0
        %v574 = vadd.f32 %v541, %v573
        %575 = vmatmul.bf16.gmra.mxu0 %v560
        %v576 = vpop.f32.mrf.mxu0
        %v577 = vadd.f32 %v541, %v576
        %v578 = vpop.f32.mrf.mxu0
        %v579 = vadd.f32 %v541, %v578
        %580 = vdwg.mxu0
        %581 = vmatpush.bf16.msra.mxu0 0
        %582 = vmatpush.bf16.msra.mxu0 0
        %583 = vmatpush.bf16.msra.mxu0 0
        %584 = vmatpush.bf16.msra.mxu0 0
        %585 = vmatpush.bf16.msra.mxu0 0
        %586 = vmatpush.bf16.msra.mxu0 0
        %587 = vmatpush.bf16.msra.mxu0 0
        %588 = vmatpush.bf16.msra.mxu0 %v552
        %589 = vmatmul.bf16.gmra.mxu0 %v557
        %v590 = vpop.f32.mrf.mxu0
        %v591 = vadd.f32 %v542, %v590
        %v592 = vpop.f32.mrf.mxu0
        %v593 = vadd.f32 %v542, %v592
        %594 = vmatmul.bf16.gmra.mxu0 %v560
        %v595 = vpop.f32.mrf.mxu0
        %v596 = vadd.f32 %v542, %v595
        %v597 = vpop.f32.mrf.mxu0
        %v598 = vadd.f32 %v542, %v597
        %599 = vdwg.mxu0
        %vm600 = vcmp.ge.f32.partialorder %v572, 0.0
        %vm601 = vcmp.ge.f32.partialorder %v591, 0.0
        %vm602 = vcmp.ge.f32.partialorder %v574, 0.0
        %vm603 = vcmp.ge.f32.partialorder %v593, 0.0
        %vm604 = vcmp.ge.f32.partialorder %v577, 0.0
        %vm605 = vcmp.ge.f32.partialorder %v596, 0.0
        %vm606 = vcmp.ge.f32.partialorder %v579, 0.0
        %vm607 = vcmp.ge.f32.partialorder %v598, 0.0
        %v608 = vmul.f32 %v572, 0.01
        %v609 = vmul.f32 %v591, 0.01
        %v610 = vmul.f32 %v574, 0.01
        %v611 = vmul.f32 %v593, 0.01
        %v612 = vmul.f32 %v577, 0.01
        %v613 = vmul.f32 %v596, 0.01
        %v614 = vmul.f32 %v579, 0.01
        %v615 = vmul.f32 %v598, 0.01
        %v616 = vsel %vm600, %v572, %v608
        %v617 = vsel %vm601, %v591, %v609
        %v618 = vsel %vm602, %v574, %v610
        %v619 = vsel %vm603, %v593, %v611
        %v620 = vsel %vm604, %v577, %v612
        %v621 = vsel %vm605, %v596, %v613
        %v622 = vsel %vm606, %v579, %v614
        %v623 = vsel %vm607, %v598, %v615
        %v624 = vpack.c.bf16 %v618, %v616
        %v625 = vpack.c.bf16 %v619, %v617
        %v626 = vpack.c.bf16 %v622, %v620
        %v627 = vpack.c.bf16 %v623, %v621
        %v628 = vld [vmem:[%s6] sm:$0xf]
        %v629 = vld [vmem:[%s6 + $0x4] sm:$0xf]
        %v630 = vld [vmem:[%s6 + $0x8] sm:$0xf]
        %v631 = vld [vmem:[%s6 + $0xc] sm:$0xf]
        %v632 = vld [vmem:[%s6 + $0x10] sm:$0xf]
        %v633 = vld [vmem:[%s6 + $0x14] sm:$0xf]
        %v634 = vld [vmem:[%s6 + $0x18] sm:$0xf]
        %v635 = vld [vmem:[%s6 + $0x1c] sm:$0xf]
        %v636 = vld [vmem:[%s6 + $0x20] sm:$0xf]
        %v637 = vld [vmem:[%s6 + $0x24] sm:$0xf]
        %v638 = vld [vmem:[%s6 + $0x28] sm:$0xf]
        %v639 = vld [vmem:[%s6 + $0x2c] sm:$0xf]
        %v640 = vld [vmem:[%s6 + $0x30] sm:$0xf]
        %v641 = vld [vmem:[%s6 + $0x34] sm:$0xf]
        %v642 = vld [vmem:[%s6 + $0x38] sm:$0xf]
        %v643 = vld [vmem:[%s6 + $0x3c] sm:$0xf]
        %v644 = vld [vmem:[%s6 + $0x40] sm:$0xf]
        %v645 = vld [vmem:[%s6 + $0x44] sm:$0xf]
        %v646 = vld [vmem:[%s6 + $0x48] sm:$0xf]
        %v647 = vld [vmem:[%s6 + $0x4c] sm:$0xf]
        %v648 = vld [vmem:[%s6 + $0x50] sm:$0xf]
        %v649 = vld [vmem:[%s6 + $0x54] sm:$0xf]
        %v650 = vld [vmem:[%s6 + $0x58] sm:$0xf]
        %v651 = vld [vmem:[%s6 + $0x5c] sm:$0xf]
        %v652 = vld [vmem:[%s6 + $0x60] sm:$0xf]
        %v653 = vld [vmem:[%s6 + $0x64] sm:$0xf]
        %v654 = vld [vmem:[%s6 + $0x68] sm:$0xf]
        %v655 = vld [vmem:[%s6 + $0x6c] sm:$0xf]
        %v656 = vld [vmem:[%s6 + $0x70] sm:$0xf]
        %v657 = vld [vmem:[%s6 + $0x74] sm:$0xf]
        %v658 = vld [vmem:[%s6 + $0x78] sm:$0xf]
        %v659 = vld [vmem:[%s6 + $0x7c] sm:$0xf]
        %v660 = vld [vmem:[%s8] sm:$0x1]
        %v662 = vperm.slane %v660, 0
        %v696 = vunpack.c.l.b16 %v628
        %v697 = vunpack.c.l.b16 %v629
        %v698 = vunpack.c.l.b16 %v630
        %v699 = vunpack.c.l.b16 %v631
        %v700 = vunpack.c.l.b16 %v632
        %v701 = vunpack.c.l.b16 %v633
        %v702 = vunpack.c.l.b16 %v634
        %v703 = vunpack.c.l.b16 %v635
        %v704 = vunpack.c.l.b16 %v636
        %v705 = vunpack.c.l.b16 %v637
        %v706 = vunpack.c.l.b16 %v638
        %v707 = vunpack.c.l.b16 %v639
        %v708 = vunpack.c.l.b16 %v640
        %v709 = vunpack.c.l.b16 %v641
        %v710 = vunpack.c.l.b16 %v642
        %v711 = vunpack.c.l.b16 %v643
        %v712 = vunpack.c.l.b16 %v644
        %v713 = vunpack.c.l.b16 %v645
        %v714 = vunpack.c.l.b16 %v646
        %v715 = vunpack.c.l.b16 %v647
        %v716 = vunpack.c.l.b16 %v648
        %v717 = vunpack.c.l.b16 %v649
        %v718 = vunpack.c.l.b16 %v650
        %v719 = vunpack.c.l.b16 %v651
        %v720 = vunpack.c.l.b16 %v652
        %v721 = vunpack.c.l.b16 %v653
        %v722 = vunpack.c.l.b16 %v654
        %v723 = vunpack.c.l.b16 %v655
        %v724 = vunpack.c.l.b16 %v656
        %v725 = vunpack.c.l.b16 %v657
        %v726 = vunpack.c.l.b16 %v658
        %v727 = vunpack.c.l.b16 %v659
        %v728 = vpack.c.b16 %v697, %v696
        %v729 = vpack.c.b16 %v699, %v698
        %v730 = vpack.c.b16 %v701, %v700
        %v731 = vpack.c.b16 %v703, %v702
        %v732 = vpack.c.b16 %v705, %v704
        %v733 = vpack.c.b16 %v707, %v706
        %v734 = vpack.c.b16 %v709, %v708
        %v735 = vpack.c.b16 %v711, %v710
        %v736 = vpack.c.b16 %v713, %v712
        %v737 = vpack.c.b16 %v715, %v714
        %v738 = vpack.c.b16 %v717, %v716
        %v739 = vpack.c.b16 %v719, %v718
        %v740 = vpack.c.b16 %v721, %v720
        %v741 = vpack.c.b16 %v723, %v722
        %v742 = vpack.c.b16 %v725, %v724
        %v743 = vpack.c.b16 %v727, %v726
        %760 = vmatpush.bf16.msra.mxu0 %v735
        %761 = vmatpush.bf16.msra.mxu0 %v734
        %762 = vmatpush.bf16.msra.mxu0 %v733
        %763 = vmatpush.bf16.msra.mxu0 %v732
        %764 = vmatpush.bf16.msra.mxu0 %v731
        %765 = vmatpush.bf16.msra.mxu0 %v730
        %766 = vmatpush.bf16.msra.mxu0 %v729
        %767 = vmatpush.bf16.msra.mxu0 %v728
        %768 = vmatmul.bf16.gmra.mxu0 %v624
        %v769 = vpop.f32.mrf.mxu0
        %v770 = vadd.f32 %v662, %v769
        %v771 = vpop.f32.mrf.mxu0
        %v772 = vadd.f32 %v662, %v771
        %773 = vmatmul.bf16.gmra.mxu0 %v626
        %v774 = vpop.f32.mrf.mxu0
        %v775 = vadd.f32 %v662, %v774
        %v776 = vpop.f32.mrf.mxu0
        %v777 = vadd.f32 %v662, %v776
        %778 = vdwg.mxu0
        %779 = vmatpush.bf16.msra.mxu0 %v743
        %780 = vmatpush.bf16.msra.mxu0 %v742
        %781 = vmatpush.bf16.msra.mxu0 %v741
        %782 = vmatpush.bf16.msra.mxu0 %v740
        %783 = vmatpush.bf16.msra.mxu0 %v739
        %784 = vmatpush.bf16.msra.mxu0 %v738
        %785 = vmatpush.bf16.msra.mxu0 %v737
        %786 = vmatpush.bf16.msra.mxu0 %v736
        %787 = vmatmul.bf16.gmra.mxu0 %v625
        %v788 = vpop.f32.mrf.mxu0
        %v789 = vadd.f32 %v770, %v788
        %v790 = vpop.f32.mrf.mxu0
        %v791 = vadd.f32 %v772, %v790
        %792 = vmatmul.bf16.gmra.mxu0 %v627
        %v793 = vpop.f32.mrf.mxu0
        %v794 = vadd.f32 %v775, %v793
        %v795 = vpop.f32.mrf.mxu0
        %v796 = vadd.f32 %v777, %v795
        %797 = vdwg.mxu0
        %v798 = vld [vmem:[%s506] sm:$0xff]
        %v799 = vld [vmem:[%s506 + $0x8] sm:$0xff]
        %v800 = vld [vmem:[%s506 + $0x10] sm:$0xff]
        %v801 = vld [vmem:[%s506 + $0x18] sm:$0xff]
        %v802 = vld [vmem:[%s7] sm:$0x3]
        %v803 = vunpack.c.l.bf16 %v802
        %805 = vset.pattern.permute.xlu0 0
        %806 = vperm.xlu0 %805, %v798
        %v807 = vpop.permute.xlu0 %806
        %810 = vset.pattern.permute.xlu0 0
        %811 = vperm.xlu0 %810, %v799
        %v812 = vpop.permute.xlu0 %811
        %815 = vset.pattern.permute.xlu0 0
        %816 = vperm.xlu0 %815, %v800
        %v817 = vpop.permute.xlu0 %816
        %820 = vset.pattern.permute.xlu0 0
        %821 = vperm.xlu0 %820, %v801
        %v822 = vpop.permute.xlu0 %821
        %v824 = vperm.slane %v803, 0
        %v825 = vmul.f32 %v807, %v824
        %v826 = vmul.f32 %v812, %v824
        %v827 = vmul.f32 %v817, %v824
        %v828 = vmul.f32 %v822, %v824
        %v829 = vadd.f32 %v789, %v825
        %v830 = vadd.f32 %v791, %v826
        %v831 = vadd.f32 %v794, %v827
        %v832 = vadd.f32 %v796, %v828
        %833 = vset.pattern.permute.xlu0 1
        %834 = vperm.xlu0 %833, %v798
        %v835 = vpop.permute.xlu0 %834
        %837 = vset.pattern.permute.xlu0 1
        %838 = vperm.xlu0 %837, %v799
        %v839 = vpop.permute.xlu0 %838
        %841 = vset.pattern.permute.xlu0 1
        %842 = vperm.xlu0 %841, %v800
        %v843 = vpop.permute.xlu0 %842
        %845 = vset.pattern.permute.xlu0 1
        %846 = vperm.xlu0 %845, %v801
        %v847 = vpop.permute.xlu0 %846
        %v849 = vperm.slane %v803, 1
        %v850 = vmul.f32 %v835, %v849
        %v851 = vmul.f32 %v839, %v849
        %v852 = vmul.f32 %v843, %v849
        %v853 = vmul.f32 %v847, %v849
        %v854 = vadd.f32 %v829, %v850
        %v855 = vadd.f32 %v830, %v851
        %v856 = vadd.f32 %v831, %v852
        %v857 = vadd.f32 %v832, %v853
        %858 = vset.pattern.permute.xlu0 2
        %859 = vperm.xlu0 %858, %v798
        %v860 = vpop.permute.xlu0 %859
        %862 = vset.pattern.permute.xlu0 2
        %863 = vperm.xlu0 %862, %v799
        %v864 = vpop.permute.xlu0 %863
        %866 = vset.pattern.permute.xlu0 2
        %867 = vperm.xlu0 %866, %v800
        %v868 = vpop.permute.xlu0 %867
        %870 = vset.pattern.permute.xlu0 2
        %871 = vperm.xlu0 %870, %v801
        %v872 = vpop.permute.xlu0 %871
        %v874 = vperm.slane %v803, 2
        %v875 = vmul.f32 %v860, %v874
        %v876 = vmul.f32 %v864, %v874
        %v877 = vmul.f32 %v868, %v874
        %v878 = vmul.f32 %v872, %v874
        %v879 = vadd.f32 %v854, %v875
        %v880 = vadd.f32 %v855, %v876
        %v881 = vadd.f32 %v856, %v877
        %v882 = vadd.f32 %v857, %v878
        %883 = vset.pattern.permute.xlu0 3
        %884 = vperm.xlu0 %883, %v798
        %v885 = vpop.permute.xlu0 %884
        %887 = vset.pattern.permute.xlu0 3
        %888 = vperm.xlu0 %887, %v799
        %v889 = vpop.permute.xlu0 %888
        %891 = vset.pattern.permute.xlu0 3
        %892 = vperm.xlu0 %891, %v800
        %v893 = vpop.permute.xlu0 %892
        %895 = vset.pattern.permute.xlu0 3
        %896 = vperm.xlu0 %895, %v801
        %v897 = vpop.permute.xlu0 %896
        %v899 = vperm.slane %v803, 3
        %v900 = vmul.f32 %v885, %v899
        %v901 = vmul.f32 %v889, %v899
        %v902 = vmul.f32 %v893, %v899
        %v903 = vmul.f32 %v897, %v899
        %v904 = vadd.f32 %v879, %v900
        %v905 = vadd.f32 %v880, %v901
        %v906 = vadd.f32 %v881, %v902
        %v907 = vadd.f32 %v882, %v903
        %vm908 = vcmp.ge.f32.partialorder %v904, 0.0
        %vm909 = vcmp.ge.f32.partialorder %v905, 0.0
        %vm910 = vcmp.ge.f32.partialorder %v906, 0.0
        %vm911 = vcmp.ge.f32.partialorder %v907, 0.0
        %v912 = vmul.f32 %v904, 0.01
        %v913 = vmul.f32 %v905, 0.01
        %v914 = vmul.f32 %v906, 0.01
        %v915 = vmul.f32 %v907, 0.01
        %v916 = vsel %vm908, %v904, %v912
        %v917 = vsel %vm909, %v905, %v913
        %v918 = vsel %vm910, %v906, %v914
        %v919 = vsel %vm911, %v907, %v915
        %v920 = vpack.c.bf16 %v917, %v916
        %v921 = vpack.c.bf16 %v919, %v918
        %v922 = vld [vmem:[#allocation7] sm:$0xf]
        %v923 = vld [vmem:[#allocation7 + $0x4] sm:$0xf]
        %v924 = vld [vmem:[#allocation7 + $0x8] sm:$0xf]
        %v925 = vld [vmem:[#allocation7 + $0xc] sm:$0xf]
        %v926 = vld [vmem:[#allocation7 + $0x10] sm:$0xf]
        %v927 = vld [vmem:[#allocation7 + $0x14] sm:$0xf]
        %v928 = vld [vmem:[#allocation7 + $0x18] sm:$0xf]
        %v929 = vld [vmem:[#allocation7 + $0x1c] sm:$0xf]
        %v930 = vld [vmem:[#allocation7 + $0x20] sm:$0xf]
        %v931 = vld [vmem:[#allocation7 + $0x24] sm:$0xf]
        %v932 = vld [vmem:[#allocation7 + $0x28] sm:$0xf]
        %v933 = vld [vmem:[#allocation7 + $0x2c] sm:$0xf]
        %v934 = vld [vmem:[#allocation7 + $0x30] sm:$0xf]
        %v935 = vld [vmem:[#allocation7 + $0x34] sm:$0xf]
        %v936 = vld [vmem:[#allocation7 + $0x38] sm:$0xf]
        %v937 = vld [vmem:[#allocation7 + $0x3c] sm:$0xf]
        %v938 = vld [vmem:[%s10] sm:$0x1]
        %v940 = vperm.slane %v938, 0
        %v958 = vunpack.c.l.b16 %v922
        %v959 = vunpack.c.l.b16 %v923
        %v960 = vunpack.c.l.b16 %v924
        %v961 = vunpack.c.l.b16 %v925
        %v962 = vunpack.c.l.b16 %v926
        %v963 = vunpack.c.l.b16 %v927
        %v964 = vunpack.c.l.b16 %v928
        %v965 = vunpack.c.l.b16 %v929
        %v966 = vunpack.c.l.b16 %v930
        %v967 = vunpack.c.l.b16 %v931
        %v968 = vunpack.c.l.b16 %v932
        %v969 = vunpack.c.l.b16 %v933
        %v970 = vunpack.c.l.b16 %v934
        %v971 = vunpack.c.l.b16 %v935
        %v972 = vunpack.c.l.b16 %v936
        %v973 = vunpack.c.l.b16 %v937
        %v974 = vpack.c.b16 %v959, %v958
        %v975 = vpack.c.b16 %v961, %v960
        %v976 = vpack.c.b16 %v963, %v962
        %v977 = vpack.c.b16 %v965, %v964
        %v978 = vpack.c.b16 %v967, %v966
        %v979 = vpack.c.b16 %v969, %v968
        %v980 = vpack.c.b16 %v971, %v970
        %v981 = vpack.c.b16 %v973, %v972
        %990 = vmatpush.bf16.msra.mxu0 %v981
        %991 = vmatpush.bf16.msra.mxu0 %v980
        %992 = vmatpush.bf16.msra.mxu0 %v979
        %993 = vmatpush.bf16.msra.mxu0 %v978
        %994 = vmatpush.bf16.msra.mxu0 %v977
        %995 = vmatpush.bf16.msra.mxu0 %v976
        %996 = vmatpush.bf16.msra.mxu0 %v975
        %997 = vmatpush.bf16.msra.mxu0 %v974
        %998 = vmatmul.bf16.gmra.mxu0 %v920
        %v999 = vpop.f32.mrf.mxu0
        %v1000 = vadd.f32 %v940, %v999
        %v1001 = vpop.f32.mrf.mxu0
        %v1002 = vadd.f32 %v940, %v1001
        %1003 = vmatmul.bf16.gmra.mxu0 %v921
        %v1004 = vpop.f32.mrf.mxu0
        %v1005 = vadd.f32 %v940, %v1004
        %v1006 = vpop.f32.mrf.mxu0
        %v1007 = vadd.f32 %v940, %v1006
        %1008 = vdwg.mxu0
        %vm1009 = vcmp.ge.f32.partialorder %v1000, 0.0
        %vm1010 = vcmp.ge.f32.partialorder %v1002, 0.0
        %vm1011 = vcmp.ge.f32.partialorder %v1005, 0.0
        %vm1012 = vcmp.ge.f32.partialorder %v1007, 0.0
        %v1013 = vmul.f32 %v1000, 0.01
        %v1014 = vmul.f32 %v1002, 0.01
        %v1015 = vmul.f32 %v1005, 0.01
        %v1016 = vmul.f32 %v1007, 0.01
        %v1017 = vsel %vm1009, %v1000, %v1013
        %v1018 = vsel %vm1010, %v1002, %v1014
        %v1019 = vsel %vm1011, %v1005, %v1015
        %v1020 = vsel %vm1012, %v1007, %v1016
        %v1021 = vld [vmem:[%s11] sm:$0x1]
        %v1022 = vunpack.c.l.bf16 %v1021
        %v1023 = vperm.slane %v1022, 0
        %v1024 = vmul.f32 %v1017, %v1023
        %v1025 = vmul.f32 %v1018, %v1023
        %v1026 = vmul.f32 %v1019, %v1023
        %v1027 = vmul.f32 %v1020, %v1023
        %1028 = vadd.xlane.f32.xlu0 %v1024
        %v1029 = vpop.xlane.xlu0 %1028
        %1030 = vadd.xlane.f32.xlu0 %v1025
        %v1031 = vpop.xlane.xlu0 %1030
        %1032 = vadd.xlane.f32.xlu0 %v1026
        %v1033 = vpop.xlane.xlu0 %1032
        %1034 = vadd.xlane.f32.xlu0 %v1027
        %v1035 = vpop.xlane.xlu0 %1034
        %v1036 = vld [vmem:[#allocation2] sm:$0x1]
        %v1038 = vperm.slane %v1036, 0
        %v1040 = vadd.f32 %v1029, %v1038
        %v1041 = vadd.f32 %v1031, %v1038
        %v1042 = vadd.f32 %v1033, %v1038
        %v1043 = vadd.f32 %v1035, %v1038
        %vm1044 = vcmask 7168
        %1045 = vst.msk [vmem:[%s512] sm:$0xff] %vm1044, %v1040
        %1046 = vst.msk [vmem:[%s512 + $0x8] sm:$0xff] %vm1044, %v1041
        %1047 = vst.msk [vmem:[%s512 + $0x10] sm:$0xff] %vm1044, %v1042
        %1048 = vst.msk [vmem:[%s512 + $0x18] sm:$0xff] %vm1044, %v1043
        %s1049 = smul.u32 4, %s28
        %p1050 = scmp.lt.s32.totalorder %s1049, 7
        %s1051 = scalar_select %p1050, %s1049, 7
        %s1052 = smul.addr %s1051, 8
        %s1053 = scalar_lea.vmem %s13, %s1052
        // Predicated region
        $region85: #{tpu_custom_call.1} parent=71 // pred_check
          %p1054 = pneg %p329
        $region86: #{tpu_custom_call.1} parent=71 // pred_check_branch
          %1056 = sbr.rel (%p1054) target = $region88
        $region87: #{tpu_custom_call.1} parent=71 // pred_region
          %s1057 = smul.u32 4, %s28
        $region88: #{tpu_custom_call.1} parent=71 // pred_fallthru
          _
      $region72: #{tpu_custom_call.1} parent=5 // pred_fallthru
        _
      %p1058 = scmp.le.s32.totalorder 2, %s23
      // Predicated region
      $region89: #{tpu_custom_call.1} parent=5 // pred_check
        %p1059 = pneg %p1058
      $region90: #{tpu_custom_call.1} parent=5 // pred_check_branch
        %1061 = sbr.rel (%p1059) target = $region92
      $region91: #{tpu_custom_call.1} parent=5 // pred_region
        %s1062 = ssub.s32 %s23, 2
        // Predicated region
        $region93: #{tpu_custom_call.1} parent=91 // pred_check
          %p1063 = pneg %p335
        $region94: #{tpu_custom_call.1} parent=91 // pred_check_branch
          %1065 = sbr.rel (%p1063) target = $region96
        $region95: #{tpu_custom_call.1} parent=91 // pred_region
          %s1066 = smul.u32 4, %s29
          %p1067 = scmp.lt.s32.totalorder %s1066, 7
          %s1068 = scalar_select %p1067, %s1066, 7
          %s1069 = smul.addr %s1068, 8
          %s1070 = scalar_lea.vmem %s13, %s1069
        $region96: #{tpu_custom_call.1} parent=91 // pred_fallthru
          _
      $region92: #{tpu_custom_call.1} parent=5 // pred_fallthru
        _
    $region6: #{tpu_custom_call.1} parent=1 // loop_footer
      %s27 = sadd.s32 1, %s23
    $region7: #{tpu_custom_call.1} parent=1 // loop_footer_branch
      %22 = sbr.rel target = $region3
    $region8: #{tpu_custom_call.1} parent=1 // loop_exit
      _
    %1071 = vsyncpa [#allocation4], 1
    %s1072 = scalar_lea.sflag [#allocation4], 1
    %1073 = vsyncpa %s1072, 1
    %1074 = vsyncpa [#allocation6], 1

</llo_original>
